<compile_context>
chip_gen: v6e
topology: v6e:2x2x1
jax: 0.10.0
libtpu: 0.0.40
codegen_flags: <defaults>
</compile_context>

<pallas_src>
import jax
import jax.numpy as jnp
from jax import lax
from jax.experimental import pallas as pl
from jax.experimental.pallas import tpu as pltpu


def _round_up(n, m):
    return ((n + m - 1) // m) * m


def _net2_kernel(x_ref, w1t_ref, b1_ref, w2t_ref, b2_ref, w3t_ref, b3_ref, o_ref):
    # x arrives batch-major (tb, F); all activations are kept feature-major
    # (features, batch_tile) so the batch lives on the 128-wide lane axis.
    x = x_ref[...]                                                    # (tb, F) f32

    # fc1 -> relu (dropout = identity in eval). Contract the feature axes of
    # W1^T (nh1, F) and x (tb, F): the x relayout happens in-kernel on the XLU.
    h1 = lax.dot_general(w1t_ref[...], x, (((1,), (1,)), ((), ())),
                         preferred_element_type=jnp.float32)          # (nh1, tb)
    h1 = jnp.maximum(h1 + b1_ref[...], 0.0)

    # fc2 -> relu (dropout = identity in eval)
    h2 = jnp.dot(w2t_ref[...], h1, preferred_element_type=jnp.float32)  # (nh2, tb)
    h2 = jnp.maximum(h2 + b2_ref[...], 0.0)

    # output -> relu(relu(.)) == relu(.)
    y = jnp.dot(w3t_ref[...], h2, preferred_element_type=jnp.float32)   # (1, tb)
    y = jnp.maximum(y + b3_ref[...], 0.0)

    # Fold the batch onto sublanes x lanes -> dense (tb//128, 128) store
    # (no 8x sublane padding of the HBM output, no masked vst).
    o_ref[...] = y.reshape(o_ref.shape).astype(o_ref.dtype)


@jax.jit
def net2_forward(x, params):
    """x: [B, n_features] float32. params: W* in [in, out] layout, b* in [1, out]."""
    B, F = x.shape
    nh1 = params["W1"].shape[1]
    nh2 = params["W2"].shape[1]

    # Batch tile: as large as possible (amortize ~0.35us/step pipeline overhead) while
    #  - keeping >=2 grid steps (~4) for large batches so v7x's 2 TensorCores share work,
    #  - keeping the (tb//128, 128) output blocks sublane-aligned (tb multiple of 1024
    #    whenever there is more than one step),
    #  - staying far under every generation's VMEM (tb=16384 -> ~10 MiB resident).
    TB_MAX = 16384
    b128 = _round_up(max(B, 1), 128)
    if b128 <= 1024:
        tb = b128                                        # tiny batch: single step
    else:
        tb = min(TB_MAX, max(1024, _round_up(b128 // 4, 1024)))
    b_pad = _round_up(B, tb)
    grid = (b_pad // tb,)

    # x is streamed in its natural (B, F) f32 layout -- no cast / transpose HBM pass.
    xp = x.astype(jnp.float32)
    if b_pad != B:
        xp = jnp.pad(xp, ((0, b_pad - B), (0, 0)))       # (b_pad, F)

    # Weights pre-transposed to [out, in] (PyTorch layout); biases as columns. All tiny,
    # VMEM-resident across the whole grid via constant-index BlockSpecs.
    w1t = params["W1"].T.astype(jnp.float32)             # (nh1, F)
    w2t = params["W2"].T.astype(jnp.float32)             # (nh2, nh1)
    w3t = params["W3"].T.astype(jnp.float32)             # (1,   nh2)
    b1 = params["b1"].T.astype(jnp.float32)              # (nh1, 1)
    b2 = params["b2"].T.astype(jnp.float32)              # (nh2, 1)
    b3 = params["b3"].T.astype(jnp.float32)              # (1,   1)

    const = lambda i: (0, 0)
    flops = 2 * b_pad * (F * nh1 + nh1 * nh2 + nh2 * 1)
    bytes_accessed = (xp.size + b_pad                      # x read + packed output write
                      + w1t.size + w2t.size + w3t.size + nh1 + nh2 + 1) * 4

    out = pl.pallas_call(
        _net2_kernel,
        out_shape=jax.ShapeDtypeStruct((b_pad // 128, 128), jnp.float32),
        grid=grid,
        in_specs=[
            pl.BlockSpec((tb, F), lambda i: (i, 0)),      # x: streamed over batch tiles
            pl.BlockSpec((nh1, F), const),
            pl.BlockSpec((nh1, 1), const),
            pl.BlockSpec((nh2, nh1), const),
            pl.BlockSpec((nh2, 1), const),
            pl.BlockSpec((1, nh2), const),
            pl.BlockSpec((1, 1), const),
        ],
        out_specs=pl.BlockSpec((tb // 128, 128), lambda i: (i, 0)),
        compiler_params=pltpu.CompilerParams(
            dimension_semantics=("parallel",),            # dual-TC sharding on v7x
            vmem_limit_bytes=32 * 1024 * 1024,            # v5e scoped default is only 16 MiB
        ),
        cost_estimate=pl.CostEstimate(flops=flops, transcendentals=0,
                                      bytes_accessed=bytes_accessed),
    )(xp, w1t, b1, w2t, b2, w3t, b3)

    # Row-major flatten of the (b_pad//128, 128) tile recovers batch order.
    return out.reshape(-1)[:B].reshape(B, 1)


def init_params(key, n_features=20, nhidden1=20, nhidden2=20):
    """Deterministic synthetic parameters (PyTorch-Linear-like uniform init), [in, out] layout."""
    ks = jax.random.split(key, 6)

    def lin(kw, kb, fan_in, fan_out):
        bound = 1.0 / jnp.sqrt(fan_in)
        W = jax.random.uniform(kw, (fan_in, fan_out), jnp.float32, -bound, bound)
        b = jax.random.uniform(kb, (1, fan_out), jnp.float32, -bound, bound)
        return W, b

    W1, b1 = lin(ks[0], ks[1], n_features, nhidden1)
    W2, b2 = lin(ks[2], ks[3], nhidden1, nhidden2)
    W3, b3 = lin(ks[4], ks[5], nhidden2, 1)
    return {"W1": W1, "b1": b1, "W2": W2, "b2": b2, "W3": W3, "b3": b3}


def _reference_forward(x, p):
    # Plain f32 forward, matching the PyTorch module in eval mode.
    h1 = jnp.maximum(x @ p["W1"] + p["b1"], 0.0)
    h2 = jnp.maximum(h1 @ p["W2"] + p["b2"], 0.0)
    return jnp.maximum(h2 @ p["W3"] + p["b3"], 0.0)


if __name__ == "__main__":
    key = jax.random.PRNGKey(0)
    k_x, k_p = jax.random.split(key)

    B, n_features = 8, 20
    x = jax.random.normal(k_x, (B, n_features), jnp.float32)
    params = init_params(k_p, n_features=n_features, nhidden1=20, nhidden2=20)

    out = jax.block_until_ready(net2_forward(x, params))

    ref = _reference_forward(x, params)
    assert out.shape == (B, 1), out.shape
    # Tolerance covers MXU default-precision rounding of f32 matmuls on real TPUs.
    assert jnp.allclose(out, ref, atol=2e-2, rtol=2e-2), "mismatch vs reference"

    print("KERNEL_OK")
</pallas_src>

<mosaic_0001>
module attributes {stable_mosaic.version = 11 : i64} {
  func.func @_net2_kernel(%arg0: i32, %arg1: memref<128x20xf32, #tpu.memory_space<vmem>>, %arg2: memref<20x20xf32, #tpu.memory_space<vmem>>, %arg3: memref<20x1xf32, #tpu.memory_space<vmem>>, %arg4: memref<20x20xf32, #tpu.memory_space<vmem>>, %arg5: memref<20x1xf32, #tpu.memory_space<vmem>>, %arg6: memref<1x20xf32, #tpu.memory_space<vmem>>, %arg7: memref<1x1xf32, #tpu.memory_space<vmem>>, %arg8: memref<1x128xf32, #tpu.memory_space<vmem>>) attributes {dimension_semantics = [#tpu.dimension_semantics<parallel>], iteration_bounds = array<i64: 1>, scalar_prefetch = 0 : i64, scratch_operands = 0 : i64, tpu.core_type = #tpu.core_type<tc>, window_params = [{transform_indices = @transform_0, window_bounds = array<i64: 128, 20>}, {pipeline_mode = #tpu.pipeline_mode<synchronous>, transform_indices = @transform_1, window_bounds = array<i64: 20, 20>}, {pipeline_mode = #tpu.pipeline_mode<synchronous>, transform_indices = @transform_2, window_bounds = array<i64: 20, 1>}, {pipeline_mode = #tpu.pipeline_mode<synchronous>, transform_indices = @transform_3, window_bounds = array<i64: 20, 20>}, {pipeline_mode = #tpu.pipeline_mode<synchronous>, transform_indices = @transform_4, window_bounds = array<i64: 20, 1>}, {pipeline_mode = #tpu.pipeline_mode<synchronous>, transform_indices = @transform_5, window_bounds = array<i64: 1, 20>}, {pipeline_mode = #tpu.pipeline_mode<synchronous>, transform_indices = @transform_6, window_bounds = array<i64: 1, 1>}, {transform_indices = @transform_7, window_bounds = array<i64: 1, 128>}]} {
    %c0 = arith.constant 0 : index
    %c0_0 = arith.constant 0 : index
    %0 = vector.load %arg1[%c0, %c0_0] : memref<128x20xf32, #tpu.memory_space<vmem>>, vector<128x20xf32>
    %c0_1 = arith.constant 0 : index
    %c0_2 = arith.constant 0 : index
    %1 = vector.load %arg2[%c0_1, %c0_2] : memref<20x20xf32, #tpu.memory_space<vmem>>, vector<20x20xf32>
    %cst = arith.constant dense<0.000000e+00> : vector<20x128xf32>
    %2 = tpu.matmul %1, %0, %cst {dimension_numbers = #tpu.dot_dimension_numbers<[1], [1], [0], [0], [0, 0, 1, 0], [], []>} : vector<20x20xf32>, vector<128x20xf32>, vector<20x128xf32> -> vector<20x128xf32>
    %c0_3 = arith.constant 0 : index
    %c0_4 = arith.constant 0 : index
    %3 = vector.load %arg3[%c0_3, %c0_4] : memref<20x1xf32, #tpu.memory_space<vmem>>, vector<20x1xf32>
    %4 = vector.broadcast %3 : vector<20x1xf32> to vector<20x128xf32>
    %5 = arith.addf %2, %4 : vector<20x128xf32>
    %cst_5 = arith.constant 0.000000e+00 : f32
    %6 = vector.broadcast %cst_5 : f32 to vector<20x128xf32>
    %7 = arith.maximumf %5, %6 : vector<20x128xf32>
    %c0_6 = arith.constant 0 : index
    %c0_7 = arith.constant 0 : index
    %8 = vector.load %arg4[%c0_6, %c0_7] : memref<20x20xf32, #tpu.memory_space<vmem>>, vector<20x20xf32>
    %cst_8 = arith.constant dense<0.000000e+00> : vector<20x128xf32>
    %9 = tpu.matmul %8, %7, %cst_8 {dimension_numbers = #tpu.dot_dimension_numbers<[1], [0], [0], [1], [0, 0, 1, 1], [], []>} : vector<20x20xf32>, vector<20x128xf32>, vector<20x128xf32> -> vector<20x128xf32>
    %c0_9 = arith.constant 0 : index
    %c0_10 = arith.constant 0 : index
    %10 = vector.load %arg5[%c0_9, %c0_10] : memref<20x1xf32, #tpu.memory_space<vmem>>, vector<20x1xf32>
    %11 = vector.broadcast %10 : vector<20x1xf32> to vector<20x128xf32>
    %12 = arith.addf %9, %11 : vector<20x128xf32>
    %cst_11 = arith.constant 0.000000e+00 : f32
    %13 = vector.broadcast %cst_11 : f32 to vector<20x128xf32>
    %14 = arith.maximumf %12, %13 : vector<20x128xf32>
    %c0_12 = arith.constant 0 : index
    %c0_13 = arith.constant 0 : index
    %15 = vector.load %arg6[%c0_12, %c0_13] : memref<1x20xf32, #tpu.memory_space<vmem>>, vector<1x20xf32>
    %cst_14 = arith.constant dense<0.000000e+00> : vector<1x128xf32>
    %16 = tpu.matmul %15, %14, %cst_14 {dimension_numbers = #tpu.dot_dimension_numbers<[1], [0], [0], [1], [0, 0, 1, 1], [], []>} : vector<1x20xf32>, vector<20x128xf32>, vector<1x128xf32> -> vector<1x128xf32>
    %c0_15 = arith.constant 0 : index
    %c0_16 = arith.constant 0 : index
    %17 = vector.load %arg7[%c0_15, %c0_16] : memref<1x1xf32, #tpu.memory_space<vmem>>, vector<1x1xf32>
    %18 = vector.broadcast %17 : vector<1x1xf32> to vector<1x128xf32>
    %19 = arith.addf %16, %18 : vector<1x128xf32>
    %cst_17 = arith.constant 0.000000e+00 : f32
    %20 = vector.broadcast %cst_17 : f32 to vector<1x128xf32>
    %21 = arith.maximumf %19, %20 : vector<1x128xf32>
    %c0_18 = arith.constant 0 : index
    %c0_19 = arith.constant 0 : index
    %22 = vector.load %arg8[%c0_18, %c0_19] : memref<1x128xf32, #tpu.memory_space<vmem>>, vector<1x128xf32>
    tpu.vector_store %arg8[%c0_18, %c0_19], %21 {strides = array<i32>} : memref<1x128xf32, #tpu.memory_space<vmem>>, vector<1x128xf32>,
    return
  }
  func.func @transform_0(%arg0: i32) -> (i32, i32) {
    %c0_i32 = arith.constant 0 : i32
    %c0_i32_0 = arith.constant 0 : i32
    return %arg0, %c0_i32 : i32, i32
  }
  func.func @transform_1(%arg0: i32) -> (i32, i32) {
    %c0_i32 = arith.constant 0 : i32
    %c0_i32_0 = arith.constant 0 : i32
    %c0_i32_1 = arith.constant 0 : i32
    return %c0_i32, %c0_i32_0 : i32, i32
  }
  func.func @transform_2(%arg0: i32) -> (i32, i32) {
    %c0_i32 = arith.constant 0 : i32
    %c0_i32_0 = arith.constant 0 : i32
    %c0_i32_1 = arith.constant 0 : i32
    return %c0_i32, %c0_i32_0 : i32, i32
  }
  func.func @transform_3(%arg0: i32) -> (i32, i32) {
    %c0_i32 = arith.constant 0 : i32
    %c0_i32_0 = arith.constant 0 : i32
    %c0_i32_1 = arith.constant 0 : i32
    return %c0_i32, %c0_i32_0 : i32, i32
  }
  func.func @transform_4(%arg0: i32) -> (i32, i32) {
    %c0_i32 = arith.constant 0 : i32
    %c0_i32_0 = arith.constant 0 : i32
    %c0_i32_1 = arith.constant 0 : i32
    return %c0_i32, %c0_i32_0 : i32, i32
  }
  func.func @transform_5(%arg0: i32) -> (i32, i32) {
    %c0_i32 = arith.constant 0 : i32
    %c0_i32_0 = arith.constant 0 : i32
    %c0_i32_1 = arith.constant 0 : i32
    return %c0_i32, %c0_i32_0 : i32, i32
  }
  func.func @transform_6(%arg0: i32) -> (i32, i32) {
    %c0_i32 = arith.constant 0 : i32
    %c0_i32_0 = arith.constant 0 : i32
    %c0_i32_1 = arith.constant 0 : i32
    return %c0_i32, %c0_i32_0 : i32, i32
  }
  func.func @transform_7(%arg0: i32) -> (i32, i32) {
    %c0_i32 = arith.constant 0 : i32
    %c0_i32_0 = arith.constant 0 : i32
    return %arg0, %c0_i32 : i32, i32
  }
}

</mosaic_0001>

<llo_original>
// kernel: net2_forward.1
$region0: #{net2_forward.1}
  #allocation0 [shape = 'u32[]', space=smem, size = 0x4, offset = 0x4, fixed_abs, tag = 'smem constant byte address 0x4 - core index']
  #allocation1 [shape = 'u32[144,128]{1,0:T(1,128)}', space=vmem, size = 0x12000, scoped, tag = 'internal scratch']
  #allocation2 [shape = 'f32[1,1]{1,0:T(1,128)S(1)}', space=vmem, size = 0x200, scoped, tag = 'scoped memory for net2_forward.1']
  %s0 = inlined_call_operand.vmem [shape: f32[128,20], index: 0, kind: input, shape index: {}]
  %s1 = inlined_call_operand.vmem [shape: f32[20,20], index: 1, kind: input, shape index: {}]
  %s2 = inlined_call_operand.vmem [shape: f32[20,1], index: 2, kind: input, shape index: {}]
  %s3 = inlined_call_operand.vmem [shape: f32[20,20], index: 3, kind: input, shape index: {}]
  %s4 = inlined_call_operand.vmem [shape: f32[20,1], index: 4, kind: input, shape index: {}]
  %s5 = inlined_call_operand.vmem [shape: f32[1,20], index: 5, kind: input, shape index: {}]
  %s6 = inlined_call_operand.<no memory space> [shape: f32[1,1], index: 6, kind: input, shape index: {}]
  %s7 = inlined_call_operand.vmem [shape: f32[1,128], index: 7, kind: output, shape index: {}]
  %s8 = sld [smem:[#allocation0]]
  $region38: #{net2_forward.1} parent=0
    _
  %s10 = ssub.s32 1, %s8
  %s11 = scalar_select 0, %s10, %s8
  %v12 = vstv %s6
  %13 = vst [vmem:[#allocation2] sm:$0x1] %v12
  // Predicated region
  $region2: #{net2_forward.1} parent=0 // pred_check
    _
  $region3: #{net2_forward.1} parent=0 // pred_check_branch
    %15 = sbr.rel (0) target = $region5
  $region4: #{net2_forward.1} parent=0 // pred_region
    _
  $region5: #{net2_forward.1} parent=0 // pred_fallthru
    _
  // Predicated region
  $region6: #{net2_forward.1} parent=0 // pred_check
    _
  $region7: #{net2_forward.1} parent=0 // pred_check_branch
    %17 = sbr.rel (0) target = $region9
  $region8: #{net2_forward.1} parent=0 // pred_region
    _
  $region9: #{net2_forward.1} parent=0 // pred_fallthru
    _
  // Predicated region
  $region10: #{net2_forward.1} parent=0 // pred_check
    _
  $region11: #{net2_forward.1} parent=0 // pred_check_branch
    %19 = sbr.rel (0) target = $region13
  $region12: #{net2_forward.1} parent=0 // pred_region
    _
  $region13: #{net2_forward.1} parent=0 // pred_fallthru
    _
  // Predicated region
  $region14: #{net2_forward.1} parent=0 // pred_check
    _
  $region15: #{net2_forward.1} parent=0 // pred_check_branch
    %21 = sbr.rel (0) target = $region17
  $region16: #{net2_forward.1} parent=0 // pred_region
    _
  $region17: #{net2_forward.1} parent=0 // pred_fallthru
    _
  // Predicated region
  $region18: #{net2_forward.1} parent=0 // pred_check
    _
  $region19: #{net2_forward.1} parent=0 // pred_check_branch
    %23 = sbr.rel (0) target = $region21
  $region20: #{net2_forward.1} parent=0 // pred_region
    _
  $region21: #{net2_forward.1} parent=0 // pred_fallthru
    _
  // Predicated region
  $region22: #{net2_forward.1} parent=0 // pred_check
    _
  $region23: #{net2_forward.1} parent=0 // pred_check_branch
    %25 = sbr.rel (0) target = $region25
  $region24: #{net2_forward.1} parent=0 // pred_region
    _
  $region25: #{net2_forward.1} parent=0 // pred_fallthru
    _
  // Predicated region
  $region26: #{net2_forward.1} parent=0 // pred_check
    _
  $region27: #{net2_forward.1} parent=0 // pred_check_branch
    %27 = sbr.rel (0) target = $region29
  $region28: #{net2_forward.1} parent=0 // pred_region
    _
  $region29: #{net2_forward.1} parent=0 // pred_fallthru
    _
  %v28 = vld [vmem:[%s0] sm:$0xff]
  %v29 = vld [vmem:[%s0 + $0x8] sm:$0xff]
  %v30 = vld [vmem:[%s0 + $0x10] sm:$0xff]
  %v31 = vld [vmem:[%s0 + $0x18] sm:$0xff]
  %v32 = vld [vmem:[%s0 + $0x20] sm:$0xff]
  %v33 = vld [vmem:[%s0 + $0x28] sm:$0xff]
  %v34 = vld [vmem:[%s0 + $0x30] sm:$0xff]
  %v35 = vld [vmem:[%s0 + $0x38] sm:$0xff]
  %v36 = vld [vmem:[%s0 + $0x40] sm:$0xff]
  %v37 = vld [vmem:[%s0 + $0x48] sm:$0xff]
  %v38 = vld [vmem:[%s0 + $0x50] sm:$0xff]
  %v39 = vld [vmem:[%s0 + $0x58] sm:$0xff]
  %v40 = vld [vmem:[%s0 + $0x60] sm:$0xff]
  %v41 = vld [vmem:[%s0 + $0x68] sm:$0xff]
  %v42 = vld [vmem:[%s0 + $0x70] sm:$0xff]
  %v43 = vld [vmem:[%s0 + $0x78] sm:$0xff]
  %v44 = vld [vmem:[%s1] sm:$0xff]
  %v45 = vld [vmem:[%s1 + $0x8] sm:$0xff]
  %v46 = vld [vmem:[%s1 + $0x10] sm:$0xf]
  %v47 = vld [vmem:[%s2] sm:$0xff]
  %v48 = vld [vmem:[%s2 + $0x8] sm:$0xff]
  %v49 = vld [vmem:[%s2 + $0x10] sm:$0xf]
  %51 = vset.pattern.permute.xlu0 0
  %52 = vperm.xlu0 %51, %v47
  %v53 = vpop.permute.xlu0 %52
  %56 = vset.pattern.permute.xlu0 0
  %57 = vperm.xlu0 %56, %v48
  %v58 = vpop.permute.xlu0 %57
  %61 = vset.pattern.permute.xlu0 0
  %62 = vperm.xlu0 %61, %v49
  %v63 = vpop.permute.xlu0 %62
  %vm65 = vcmask 162816
  %v67 = vsel %vm65, %v44, 0
  %v70 = vsel %vm65, %v45, 0
  %v73 = vsel %vm65, %v46, 0
  %v76 = vsel %vm65, %v28, 0
  %v79 = vsel %vm65, %v29, 0
  %v82 = vsel %vm65, %v30, 0
  %v85 = vsel %vm65, %v31, 0
  %v88 = vsel %vm65, %v32, 0
  %v91 = vsel %vm65, %v33, 0
  %v94 = vsel %vm65, %v34, 0
  %v97 = vsel %vm65, %v35, 0
  %v100 = vsel %vm65, %v36, 0
  %v103 = vsel %vm65, %v37, 0
  %v106 = vsel %vm65, %v38, 0
  %v109 = vsel %vm65, %v39, 0
  %v112 = vsel %vm65, %v40, 0
  %v115 = vsel %vm65, %v41, 0
  %v118 = vsel %vm65, %v42, 0
  %v121 = vsel %vm65, %v43, 0
  %123 = vmatprep.subr.mxu0 0.0
  %124 = vmatpush1.xpose.msra.mxu0 %v121
  %125 = vmatprep.subr.mxu0 0.0
  %126 = vmatpush1.xpose.msra.mxu0 %v118
  %127 = vmatprep.subr.mxu0 0.0
  %128 = vmatpush1.xpose.msra.mxu0 %v115
  %129 = vmatprep.subr.mxu0 0.0
  %130 = vmatpush1.xpose.msra.mxu0 %v112
  %131 = vmatprep.subr.mxu0 0.0
  %132 = vmatpush1.xpose.msra.mxu0 %v109
  %133 = vmatprep.subr.mxu0 0.0
  %134 = vmatpush1.xpose.msra.mxu0 %v106
  %135 = vmatprep.subr.mxu0 0.0
  %136 = vmatpush1.xpose.msra.mxu0 %v103
  %137 = vmatprep.subr.mxu0 0.0
  %138 = vmatpush1.xpose.msra.mxu0 %v100
  %139 = vmatprep.subr.mxu0 0.0
  %140 = vmatpush1.xpose.msra.mxu0 %v97
  %141 = vmatprep.subr.mxu0 0.0
  %142 = vmatpush1.xpose.msra.mxu0 %v94
  %143 = vmatprep.subr.mxu0 0.0
  %144 = vmatpush1.xpose.msra.mxu0 %v91
  %145 = vmatprep.subr.mxu0 0.0
  %146 = vmatpush1.xpose.msra.mxu0 %v88
  %147 = vmatprep.subr.mxu0 0.0
  %148 = vmatpush1.xpose.msra.mxu0 %v85
  %149 = vmatprep.subr.mxu0 0.0
  %150 = vmatpush1.xpose.msra.mxu0 %v82
  %151 = vmatprep.subr.mxu0 0.0
  %152 = vmatpush1.xpose.msra.mxu0 %v79
  %153 = vmatprep.subr.mxu0 0.0
  %154 = vmatpush1.xpose.msra.mxu0 %v76
  %155 = vmatprep.subr.mxu0 0.0
  %156 = vmatpush2.xpose.msra.mxu0 0.0
  %157 = vmatprep.subr.mxu0 0.0
  %158 = vmatpush2.xpose.msra.mxu0 0.0
  %159 = vmatprep.subr.mxu0 0.0
  %160 = vmatpush2.xpose.msra.mxu0 0.0
  %161 = vmatprep.subr.mxu0 0.0
  %162 = vmatpush2.xpose.msra.mxu0 0.0
  %163 = vmatprep.subr.mxu0 0.0
  %164 = vmatpush2.xpose.msra.mxu0 0.0
  %165 = vmatprep.subr.mxu0 0.0
  %166 = vmatpush2.xpose.msra.mxu0 0.0
  %167 = vmatprep.subr.mxu0 0.0
  %168 = vmatpush2.xpose.msra.mxu0 0.0
  %169 = vmatprep.subr.mxu0 0.0
  %170 = vmatpush2.xpose.msra.mxu0 0.0
  %171 = vmatprep.subr.mxu0 0.0
  %172 = vmatpush2.xpose.msra.mxu0 0.0
  %173 = vmatprep.subr.mxu0 0.0
  %174 = vmatpush2.xpose.msra.mxu0 0.0
  %175 = vmatprep.subr.mxu0 0.0
  %176 = vmatpush2.xpose.msra.mxu0 0.0
  %177 = vmatprep.subr.mxu0 0.0
  %178 = vmatpush2.xpose.msra.mxu0 0.0
  %179 = vmatprep.subr.mxu0 0.0
  %180 = vmatpush2.xpose.msra.mxu0 0.0
  %181 = vmatprep.subr.mxu0 0.0
  %182 = vmatpush2.xpose.msra.mxu0 0.0
  %183 = vmatprep.subr.mxu0 0.0
  %184 = vmatpush2.xpose.msra.mxu0 0.0
  %185 = vmatprep.subr.mxu0 0.0
  %186 = vmatpush2.xpose.msra.mxu0 0.0
  %187 = vmatprep.mubr.f32.mxu0 0.0
  %188 = vmatmul.mubr.f32.gmra.mxu0 %v67
  %v189 = vpop.f32.mrf.mxu0
  %v190 = vadd.f32 %v53, %v189
  %v191 = vpop.f32.mrf.mxu0
  %192 = vmatprep.mubr.f32.mxu0 0.0
  %193 = vmatmul.mubr.f32.gmra.mxu0 %v70
  %v194 = vpop.f32.mrf.mxu0
  %v195 = vadd.f32 %v58, %v194
  %v196 = vpop.f32.mrf.mxu0
  %197 = vmatprep.mubr.f32.mxu0 0.0
  %198 = vmatmul.mubr.f32.gmra.mxu0 %v73
  %v199 = vpop.f32.mrf.mxu0
  %v200 = vadd.f32 %v63, %v199
  %v201 = vpop.f32.mrf.mxu0
  %202 = vdwg.mxu0
  %v203 = vmax.f32 %v190, 0.0
  %v204 = vmax.f32 %v195, 0.0
  %v205 = vmax.f32 %v200, 0.0
  %v206 = vld [vmem:[%s3] sm:$0xff]
  %v207 = vld [vmem:[%s3 + $0x8] sm:$0xff]
  %v208 = vld [vmem:[%s3 + $0x10] sm:$0xf]
  %v209 = vld [vmem:[%s4] sm:$0xff]
  %v210 = vld [vmem:[%s4 + $0x8] sm:$0xff]
  %v211 = vld [vmem:[%s4 + $0x10] sm:$0xf]
  %213 = vset.pattern.permute.xlu0 0
  %214 = vperm.xlu0 %213, %v209
  %v215 = vpop.permute.xlu0 %214
  %218 = vset.pattern.permute.xlu0 0
  %219 = vperm.xlu0 %218, %v210
  %v220 = vpop.permute.xlu0 %219
  %223 = vset.pattern.permute.xlu0 0
  %224 = vperm.xlu0 %223, %v211
  %v225 = vpop.permute.xlu0 %224
  %v228 = vsel %vm65, %v206, 0
  %v231 = vsel %vm65, %v207, 0
  %v234 = vsel %vm65, %v208, 0
  %vm236 = vcmask 1043456
  %v238 = vsel %vm236, %v205, 0
  %240 = vmatprep.subr.mxu0 0.0
  %241 = vmatpush1.msra.mxu0 0.0
  %242 = vmatprep.subr.mxu0 0.0
  %243 = vmatpush1.msra.mxu0 0.0
  %244 = vmatprep.subr.mxu0 0.0
  %245 = vmatpush1.msra.mxu0 0.0
  %246 = vmatprep.subr.mxu0 0.0
  %247 = vmatpush1.msra.mxu0 0.0
  %248 = vmatprep.subr.mxu0 0.0
  %249 = vmatpush1.msra.mxu0 0.0
  %250 = vmatprep.subr.mxu0 0.0
  %251 = vmatpush1.msra.mxu0 0.0
  %252 = vmatprep.subr.mxu0 0.0
  %253 = vmatpush1.msra.mxu0 0.0
  %254 = vmatprep.subr.mxu0 0.0
  %255 = vmatpush1.msra.mxu0 0.0
  %256 = vmatprep.subr.mxu0 0.0
  %257 = vmatpush1.msra.mxu0 0.0
  %258 = vmatprep.subr.mxu0 0.0
  %259 = vmatpush1.msra.mxu0 0.0
  %260 = vmatprep.subr.mxu0 0.0
  %261 = vmatpush1.msra.mxu0 0.0
  %262 = vmatprep.subr.mxu0 0.0
  %263 = vmatpush1.msra.mxu0 0.0
  %264 = vmatprep.subr.mxu0 0.0
  %265 = vmatpush1.msra.mxu0 0.0
  %266 = vmatprep.subr.mxu0 0.0
  %267 = vmatpush1.msra.mxu0 %v238
  %268 = vmatprep.subr.mxu0 0.0
  %269 = vmatpush1.msra.mxu0 %v204
  %270 = vmatprep.subr.mxu0 0.0
  %271 = vmatpush1.msra.mxu0 %v203
  %272 = vmatprep.subr.mxu0 0.0
  %273 = vmatpush2.msra.mxu0 0.0
  %274 = vmatprep.subr.mxu0 0.0
  %275 = vmatpush2.msra.mxu0 0.0
  %276 = vmatprep.subr.mxu0 0.0
  %277 = vmatpush2.msra.mxu0 0.0
  %278 = vmatprep.subr.mxu0 0.0
  %279 = vmatpush2.msra.mxu0 0.0
  %280 = vmatprep.subr.mxu0 0.0
  %281 = vmatpush2.msra.mxu0 0.0
  %282 = vmatprep.subr.mxu0 0.0
  %283 = vmatpush2.msra.mxu0 0.0
  %284 = vmatprep.subr.mxu0 0.0
  %285 = vmatpush2.msra.mxu0 0.0
  %286 = vmatprep.subr.mxu0 0.0
  %287 = vmatpush2.msra.mxu0 0.0
  %288 = vmatprep.subr.mxu0 0.0
  %289 = vmatpush2.msra.mxu0 0.0
  %290 = vmatprep.subr.mxu0 0.0
  %291 = vmatpush2.msra.mxu0 0.0
  %292 = vmatprep.subr.mxu0 0.0
  %293 = vmatpush2.msra.mxu0 0.0
  %294 = vmatprep.subr.mxu0 0.0
  %295 = vmatpush2.msra.mxu0 0.0
  %296 = vmatprep.subr.mxu0 0.0
  %297 = vmatpush2.msra.mxu0 0.0
  %298 = vmatprep.subr.mxu0 0.0
  %299 = vmatpush2.msra.mxu0 0.0
  %300 = vmatprep.subr.mxu0 0.0
  %301 = vmatpush2.msra.mxu0 0.0
  %302 = vmatprep.subr.mxu0 0.0
  %303 = vmatpush2.msra.mxu0 0.0
  %304 = vmatprep.mubr.f32.mxu0 0.0
  %305 = vmatmul.mubr.f32.gmra.mxu0 %v228
  %v306 = vpop.f32.mrf.mxu0
  %v307 = vadd.f32 %v215, %v306
  %v308 = vpop.f32.mrf.mxu0
  %309 = vmatprep.mubr.f32.mxu0 0.0
  %310 = vmatmul.mubr.f32.gmra.mxu0 %v231
  %v311 = vpop.f32.mrf.mxu0
  %v312 = vadd.f32 %v220, %v311
  %v313 = vpop.f32.mrf.mxu0
  %314 = vmatprep.mubr.f32.mxu0 0.0
  %315 = vmatmul.mubr.f32.gmra.mxu0 %v234
  %v316 = vpop.f32.mrf.mxu0
  %v317 = vadd.f32 %v225, %v316
  %v318 = vpop.f32.mrf.mxu0
  %319 = vdwg.mxu0
  %v320 = vmax.f32 %v307, 0.0
  %v321 = vmax.f32 %v312, 0.0
  %v322 = vmax.f32 %v317, 0.0
  %v323 = vld [vmem:[%s5] sm:$0x1]
  %v324 = vld [vmem:[#allocation2] sm:$0x1]
  %326 = vset.pattern.permute.xlu0 0
  %327 = vperm.xlu0 %326, %v324
  %v328 = vpop.permute.xlu0 %327
  %v330 = vlaneseq
  %v331 = vshrl.u32 %v330, 7
  %v332 = vsub.s32 0, %v331
  %v333 = vrot.slane %v328, %v332
  %v335 = vsel %vm65, %v323, 0
  %v338 = vsel %vm236, %v322, 0
  %340 = vmatprep.subr.mxu0 0.0
  %341 = vmatpush1.msra.mxu0 0.0
  %342 = vmatprep.subr.mxu0 0.0
  %343 = vmatpush1.msra.mxu0 0.0
  %344 = vmatprep.subr.mxu0 0.0
  %345 = vmatpush1.msra.mxu0 0.0
  %346 = vmatprep.subr.mxu0 0.0
  %347 = vmatpush1.msra.mxu0 0.0
  %348 = vmatprep.subr.mxu0 0.0
  %349 = vmatpush1.msra.mxu0 0.0
  %350 = vmatprep.subr.mxu0 0.0
  %351 = vmatpush1.msra.mxu0 0.0
  %352 = vmatprep.subr.mxu0 0.0
  %353 = vmatpush1.msra.mxu0 0.0
  %354 = vmatprep.subr.mxu0 0.0
  %355 = vmatpush1.msra.mxu0 0.0
  %356 = vmatprep.subr.mxu0 0.0
  %357 = vmatpush1.msra.mxu0 0.0
  %358 = vmatprep.subr.mxu0 0.0
  %359 = vmatpush1.msra.mxu0 0.0
  %360 = vmatprep.subr.mxu0 0.0
  %361 = vmatpush1.msra.mxu0 0.0
  %362 = vmatprep.subr.mxu0 0.0
  %363 = vmatpush1.msra.mxu0 0.0
  %364 = vmatprep.subr.mxu0 0.0
  %365 = vmatpush1.msra.mxu0 0.0
  %366 = vmatprep.subr.mxu0 0.0
  %367 = vmatpush1.msra.mxu0 %v338
  %368 = vmatprep.subr.mxu0 0.0
  %369 = vmatpush1.msra.mxu0 %v321
  %370 = vmatprep.subr.mxu0 0.0
  %371 = vmatpush1.msra.mxu0 %v320
  %372 = vmatprep.subr.mxu0 0.0
  %373 = vmatpush2.msra.mxu0 0.0
  %374 = vmatprep.subr.mxu0 0.0
  %375 = vmatpush2.msra.mxu0 0.0
  %376 = vmatprep.subr.mxu0 0.0
  %377 = vmatpush2.msra.mxu0 0.0
  %378 = vmatprep.subr.mxu0 0.0
  %379 = vmatpush2.msra.mxu0 0.0
  %380 = vmatprep.subr.mxu0 0.0
  %381 = vmatpush2.msra.mxu0 0.0
  %382 = vmatprep.subr.mxu0 0.0
  %383 = vmatpush2.msra.mxu0 0.0
  %384 = vmatprep.subr.mxu0 0.0
  %385 = vmatpush2.msra.mxu0 0.0
  %386 = vmatprep.subr.mxu0 0.0
  %387 = vmatpush2.msra.mxu0 0.0
  %388 = vmatprep.subr.mxu0 0.0
  %389 = vmatpush2.msra.mxu0 0.0
  %390 = vmatprep.subr.mxu0 0.0
  %391 = vmatpush2.msra.mxu0 0.0
  %392 = vmatprep.subr.mxu0 0.0
  %393 = vmatpush2.msra.mxu0 0.0
  %394 = vmatprep.subr.mxu0 0.0
  %395 = vmatpush2.msra.mxu0 0.0
  %396 = vmatprep.subr.mxu0 0.0
  %397 = vmatpush2.msra.mxu0 0.0
  %398 = vmatprep.subr.mxu0 0.0
  %399 = vmatpush2.msra.mxu0 0.0
  %400 = vmatprep.subr.mxu0 0.0
  %401 = vmatpush2.msra.mxu0 0.0
  %402 = vmatprep.subr.mxu0 0.0
  %403 = vmatpush2.msra.mxu0 0.0
  %404 = vmatprep.mubr.f32.mxu0 0.0
  %405 = vmatmul.mubr.f32.gmra.mxu0 %v335
  %v406 = vpop.f32.mrf.mxu0
  %v407 = vadd.f32 %v333, %v406
  %v408 = vpop.f32.mrf.mxu0
  %409 = vdwg.mxu0
  %v410 = vmax.f32 %v407, 0.0
  %411 = vst [vmem:[%s7] sm:$0x1] %v410
  // Predicated region
  $region30: #{net2_forward.1} parent=0 // pred_check
    _
  $region31: #{net2_forward.1} parent=0 // pred_check_branch
    %413 = sbr.rel (0) target = $region33
  $region32: #{net2_forward.1} parent=0 // pred_region
    _
  $region33: #{net2_forward.1} parent=0 // pred_fallthru
    _
  // Predicated region
  $region34: #{net2_forward.1} parent=0 // pred_check
    _
  $region35: #{net2_forward.1} parent=0 // pred_check_branch
    %415 = sbr.rel (0) target = $region37
  $region36: #{net2_forward.1} parent=0 // pred_region
    _
  $region37: #{net2_forward.1} parent=0 // pred_fallthru
    _

</llo_original>
